<compile_context>
chip_gen: v5e
topology: v5e:2x2
jax: 0.10.0
libtpu: 0.0.40
codegen_flags: <defaults>
</compile_context>

<pallas_src>
import jax
import jax.numpy as jnp
from jax.experimental import pallas as pl
from jax.experimental.pallas import tpu as pltpu


def _round_up(x: int, mult: int) -> int:
    return ((x + mult - 1) // mult) * mult


def mlp_kernel(x_ref, w1_ref, b1_ref, w2_ref, b2_ref, o_ref):
    # Layer 1: MXU matmul (f32 accumulation); bias add + ReLU on the VPU in f32.
    h = jnp.dot(x_ref[...], w1_ref[...], preferred_element_type=jnp.float32)
    h = jnp.maximum(h + b1_ref[...], 0.0)                    # b1 is (1, H1P)
    # Layer 2: lane-dense (128-wide padded) compute tile, but store only the
    # true `actions` width -> no padded writeback.
    q = jnp.dot(h.astype(w2_ref.dtype), w2_ref[...],
                preferred_element_type=jnp.float32)
    a = o_ref.shape[-1]                                       # true action width
    o_ref[...] = (q + b2_ref[...])[:, :a].astype(o_ref.dtype)


def prepare_params(w1, b1, w2, b2, *, compute_dtype=None):
    """One-time parameter prep (padding + dtype).  Call at setup, NOT per step.

    w1: [input_size, h1]   b1: [h1]
    w2: [h1, actions]      b2: [actions]
    """
    in_size, h1 = w1.shape
    actions = w2.shape[1]
    cd = compute_dtype if compute_dtype is not None else w1.dtype

    H1P = _round_up(h1, 128)        # hidden width -> lane-dense
    AP = _round_up(actions, 128)    # padded COMPUTE width of layer 2 (VMEM only)

    w1p = jnp.pad(w1.astype(cd), ((0, 0), (0, H1P - h1)))
    b1p = jnp.pad(b1.astype(jnp.float32), (0, H1P - h1)).reshape(1, H1P)
    w2p = jnp.pad(w2.astype(cd), ((0, H1P - h1), (0, AP - actions)))
    b2p = jnp.pad(b2.astype(jnp.float32), (0, AP - actions)).reshape(1, AP)

    return {"w1": w1p, "b1": b1p, "w2": w2p, "b2": b2p,
            "in_size": in_size, "h1": h1, "actions": actions}


def network_forward(state, params, *, tb=512):
    """Pallas equivalent of Network.forward.

    state : [B, input_size]
    params: output of prepare_params
    returns q: [B, actions]
    """
    B, in_size = state.shape
    w1p, b1p, w2p, b2p = params["w1"], params["b1"], params["w2"], params["b2"]
    actions = params["actions"]
    assert in_size == params["in_size"]
    H1P = w1p.shape[1]
    AP = w2p.shape[1]

    out_dtype = state.dtype
    cd = w1p.dtype
    x = state if state.dtype == cd else state.astype(cd)

    # Batch tile: multiple of 8 sublanes.  No explicit batch padding — the last
    # (overhanging) block is clipped by Pallas: out-of-range output rows are
    # discarded and the garbage input rows only feed those discarded rows.
    TB = tb if B >= tb else _round_up(B, 8)
    grid = (pl.cdiv(B, TB),)

    return pl.pallas_call(
        mlp_kernel,
        out_shape=jax.ShapeDtypeStruct((B, actions), out_dtype),
        grid_spec=pltpu.PrefetchScalarGridSpec(
            num_scalar_prefetch=0,
            grid=grid,
            in_specs=[
                # Activation tile marches over batch; weights/biases stay
                # resident (same block every step -> no re-DMA).
                pl.BlockSpec((TB, in_size), lambda i: (i, 0)),
                pl.BlockSpec((in_size, H1P), lambda i: (0, 0)),
                pl.BlockSpec((1, H1P), lambda i: (0, 0)),
                pl.BlockSpec((H1P, AP), lambda i: (0, 0)),
                pl.BlockSpec((1, AP), lambda i: (0, 0)),
            ],
            out_specs=pl.BlockSpec((TB, actions), lambda i: (i, 0)),
        ),
        compiler_params=pltpu.CompilerParams(
            dimension_semantics=("parallel",),   # v7x: shard batch over 2 TCs
        ),
    )(x, w1p, b1p, w2p, b2p)


def init_params(key, input_size, actions, h1=30, dtype=jnp.float32):
    """Deterministic init mimicking torch.nn.Linear default (U[-1/sqrt(fan_in)...]).

    Weights are stored as [in, out] so the kernel does x @ W.
    """
    k1, k2, k3, k4 = jax.random.split(key, 4)
    bound1 = 1.0 / (input_size ** 0.5)
    bound2 = 1.0 / (h1 ** 0.5)
    w1 = jax.random.uniform(k1, (input_size, h1), dtype, -bound1, bound1)
    b1 = jax.random.uniform(k2, (h1,), dtype, -bound1, bound1)
    w2 = jax.random.uniform(k3, (h1, actions), dtype, -bound2, bound2)
    b2 = jax.random.uniform(k4, (actions,), dtype, -bound2, bound2)
    return w1, b1, w2, b2


if __name__ == "__main__":
    input_size, actions, h1 = 16, 4, 30

    key = jax.random.PRNGKey(0)
    pkey, xkey = jax.random.split(key)
    w1, b1, w2, b2 = init_params(pkey, input_size, actions, h1)

    # One-time parameter prep (hoisted out of the forward pass).
    params_f32 = prepare_params(w1, b1, w2, b2)
    params_bf16 = prepare_params(w1, b1, w2, b2, compute_dtype=jnp.bfloat16)

    def ref(x):
        return jnp.maximum(x @ w1 + b1, 0.0) @ w2 + b2

    # Small batch (single clipped tile).
    state = jax.random.normal(xkey, (2, input_size), jnp.float32)
    q = jax.block_until_ready(network_forward(state, params_f32))
    assert q.shape == (2, actions)
    assert jnp.allclose(q, ref(state), atol=1e-5, rtol=1e-5)

    # Medium batch, not a multiple of 8 (grid=1, overhanging block clipped).
    s300 = jax.random.normal(jax.random.PRNGKey(1), (300, input_size), jnp.float32)
    q300 = jax.block_until_ready(network_forward(s300, params_f32))
    assert q300.shape == (300, actions)
    assert jnp.allclose(q300, ref(s300), atol=1e-5, rtol=1e-5)

    # Large batch: multi-step grid with a partial last block (1000 = 512 + 488).
    s1000 = jax.random.normal(jax.random.PRNGKey(2), (1000, input_size), jnp.float32)
    q1000 = jax.block_until_ready(network_forward(s1000, params_f32))
    assert q1000.shape == (1000, actions)
    assert jnp.allclose(q1000, ref(s1000), atol=1e-5, rtol=1e-5)

    # Optional bf16 storage/compute path (v6e/v7x HBM-byte saver), f32 accum.
    qbf = jax.block_until_ready(network_forward(s1000, params_bf16))
    assert jnp.allclose(qbf, ref(s1000), atol=1e-1, rtol=1e-1)

    print("KERNEL_OK")
</pallas_src>

<mosaic_0001>
module attributes {stable_mosaic.version = 11 : i64} {
  func.func @mlp_kernel(%arg0: i32, %arg1: memref<8x16xf32, #tpu.memory_space<vmem>>, %arg2: memref<16x128xf32, #tpu.memory_space<vmem>>, %arg3: memref<1x128xf32, #tpu.memory_space<vmem>>, %arg4: memref<128x128xf32, #tpu.memory_space<vmem>>, %arg5: memref<1x128xf32, #tpu.memory_space<vmem>>, %arg6: memref<8x4xf32, #tpu.memory_space<vmem>>) attributes {dimension_semantics = [#tpu.dimension_semantics<parallel>], iteration_bounds = array<i64: 1>, scalar_prefetch = 0 : i64, scratch_operands = 0 : i64, tpu.core_type = #tpu.core_type<tc>, window_params = [{transform_indices = @transform_0, window_bounds = array<i64: 8, 16>}, {pipeline_mode = #tpu.pipeline_mode<synchronous>, transform_indices = @transform_1, window_bounds = array<i64: 16, 128>}, {pipeline_mode = #tpu.pipeline_mode<synchronous>, transform_indices = @transform_2, window_bounds = array<i64: 1, 128>}, {pipeline_mode = #tpu.pipeline_mode<synchronous>, transform_indices = @transform_3, window_bounds = array<i64: 128, 128>}, {pipeline_mode = #tpu.pipeline_mode<synchronous>, transform_indices = @transform_4, window_bounds = array<i64: 1, 128>}, {transform_indices = @transform_5, window_bounds = array<i64: 8, 4>}]} {
    %c0 = arith.constant 0 : index
    %c0_0 = arith.constant 0 : index
    %0 = vector.load %arg1[%c0, %c0_0] : memref<8x16xf32, #tpu.memory_space<vmem>>, vector<8x16xf32>
    %c0_1 = arith.constant 0 : index
    %c0_2 = arith.constant 0 : index
    %1 = vector.load %arg2[%c0_1, %c0_2] : memref<16x128xf32, #tpu.memory_space<vmem>>, vector<16x128xf32>
    %cst = arith.constant dense<0.000000e+00> : vector<8x128xf32>
    %2 = tpu.matmul %0, %1, %cst {dimension_numbers = #tpu.dot_dimension_numbers<[1], [0], [0], [1], [0, 0, 1, 1], [], []>} : vector<8x16xf32>, vector<16x128xf32>, vector<8x128xf32> -> vector<8x128xf32>
    %c0_3 = arith.constant 0 : index
    %c0_4 = arith.constant 0 : index
    %3 = vector.load %arg3[%c0_3, %c0_4] : memref<1x128xf32, #tpu.memory_space<vmem>>, vector<1x128xf32>
    %4 = vector.broadcast %3 : vector<1x128xf32> to vector<8x128xf32>
    %5 = arith.addf %2, %4 : vector<8x128xf32>
    %cst_5 = arith.constant 0.000000e+00 : f32
    %6 = vector.broadcast %cst_5 : f32 to vector<8x128xf32>
    %7 = arith.maximumf %5, %6 : vector<8x128xf32>
    %c0_6 = arith.constant 0 : index
    %c0_7 = arith.constant 0 : index
    %8 = vector.load %arg4[%c0_6, %c0_7] : memref<128x128xf32, #tpu.memory_space<vmem>>, vector<128x128xf32>
    %cst_8 = arith.constant dense<0.000000e+00> : vector<8x128xf32>
    %9 = tpu.matmul %7, %8, %cst_8 {dimension_numbers = #tpu.dot_dimension_numbers<[1], [0], [0], [1], [0, 0, 1, 1], [], []>} : vector<8x128xf32>, vector<128x128xf32>, vector<8x128xf32> -> vector<8x128xf32>
    %c0_9 = arith.constant 0 : index
    %c0_10 = arith.constant 0 : index
    %10 = vector.load %arg5[%c0_9, %c0_10] : memref<1x128xf32, #tpu.memory_space<vmem>>, vector<1x128xf32>
    %11 = vector.broadcast %10 : vector<1x128xf32> to vector<8x128xf32>
    %12 = arith.addf %9, %11 : vector<8x128xf32>
    %13 = vector.extract_strided_slice %12 {offsets = [0, 0], sizes = [8, 4], strides = [1, 1]} : vector<8x128xf32> to vector<8x4xf32>
    %c0_11 = arith.constant 0 : index
    %c0_12 = arith.constant 0 : index
    %14 = vector.load %arg6[%c0_11, %c0_12] : memref<8x4xf32, #tpu.memory_space<vmem>>, vector<8x4xf32>
    tpu.vector_store %arg6[%c0_11, %c0_12], %13 {strides = array<i32>} : memref<8x4xf32, #tpu.memory_space<vmem>>, vector<8x4xf32>,
    return
  }
  func.func @transform_0(%arg0: i32) -> (i32, i32) {
    %c0_i32 = arith.constant 0 : i32
    %c0_i32_0 = arith.constant 0 : i32
    return %arg0, %c0_i32 : i32, i32
  }
  func.func @transform_1(%arg0: i32) -> (i32, i32) {
    %c0_i32 = arith.constant 0 : i32
    %c0_i32_0 = arith.constant 0 : i32
    %c0_i32_1 = arith.constant 0 : i32
    return %c0_i32, %c0_i32_0 : i32, i32
  }
  func.func @transform_2(%arg0: i32) -> (i32, i32) {
    %c0_i32 = arith.constant 0 : i32
    %c0_i32_0 = arith.constant 0 : i32
    %c0_i32_1 = arith.constant 0 : i32
    return %c0_i32, %c0_i32_0 : i32, i32
  }
  func.func @transform_3(%arg0: i32) -> (i32, i32) {
    %c0_i32 = arith.constant 0 : i32
    %c0_i32_0 = arith.constant 0 : i32
    %c0_i32_1 = arith.constant 0 : i32
    return %c0_i32, %c0_i32_0 : i32, i32
  }
  func.func @transform_4(%arg0: i32) -> (i32, i32) {
    %c0_i32 = arith.constant 0 : i32
    %c0_i32_0 = arith.constant 0 : i32
    %c0_i32_1 = arith.constant 0 : i32
    return %c0_i32, %c0_i32_0 : i32, i32
  }
  func.func @transform_5(%arg0: i32) -> (i32, i32) {
    %c0_i32 = arith.constant 0 : i32
    %c0_i32_0 = arith.constant 0 : i32
    return %arg0, %c0_i32 : i32, i32
  }
}

</mosaic_0001>

<llo_original>
// kernel: tpu_custom_call.1
$region0: #{tpu_custom_call.1}
  #allocation0 [shape = 'u32[]', space=smem, size = 0x4, offset = 0x4, fixed_abs, tag = 'smem constant byte address 0x4 - core index']
  #allocation1 [shape = 'u32[72,128]{1,0:T(1,128)}', space=vmem, size = 0x9000, scoped, tag = 'internal scratch']
  %s0 = inlined_call_operand.hbm [shape: f32[2,16], index: 0, kind: input, shape index: {}]
  %s1 = inlined_call_operand.hbm [shape: f32[16,128], index: 1, kind: input, shape index: {}]
  %s2 = inlined_call_operand.vmem [shape: f32[1,128], index: 2, kind: input, shape index: {}]
  %s3 = inlined_call_operand.hbm [shape: f32[128,128], index: 3, kind: input, shape index: {}]
  %s4 = inlined_call_operand.vmem [shape: f32[1,128], index: 4, kind: input, shape index: {}]
  %s5 = inlined_call_operand.hbm [shape: f32[2,4], index: 5, kind: output, shape index: {}]
  %s6 = sld [smem:[#allocation0]]
  $region42: #{tpu_custom_call.1} parent=0
    _
  %s8 = ssub.s32 1, %s6
  %s9 = scalar_select 0, %s8, %s6
  $region1: #{tpu_custom_call.1} parent=0
    #allocation2 [shape = 'u8[4096]{0}', space=vmem, size = 0x1000, scoped, tag = 'input window, operand 0, single buffered']
    #allocation3 [shape = 's32[1]{0}', space=sflag, size = 0x4, scoped, tag = 'scoped memory for tpu_custom_call.1']
    #allocation4 [shape = 's32[1]{0}', space=sflag, size = 0x4, scoped, tag = 'scoped memory for tpu_custom_call.1']
    #allocation5 [shape = 'u8[8192]{0}', space=vmem, size = 0x2000, scoped, tag = 'input window, operand 1, single buffered']
    #allocation6 [shape = 's32[1]{0}', space=sflag, size = 0x4, scoped, tag = 'scoped memory for tpu_custom_call.1']
    #allocation7 [shape = 'u8[65536]{0}', space=vmem, size = 0x10000, scoped, tag = 'input window, operand 3, single buffered']
    #allocation8 [shape = 'u8[4096]{0}', space=vmem, size = 0x1000, scoped, tag = 'output window, operand 0, single buffered']
    %10 = vsyncpa [#allocation3], 0
    %11 = vsyncpa [#allocation6], 0
    %12 = vsyncpa [#allocation4], 0
    // Predicated region
    $region2: #{tpu_custom_call.1} parent=1 // pred_check
      _
    $region3: #{tpu_custom_call.1} parent=1 // pred_check_branch
      %14 = sbr.rel (0) target = $region5
    $region4: #{tpu_custom_call.1} parent=1 // pred_region
      %16 = vsyncadd [#allocation3], 96
      %s17 = sshll.u32 %s0, 4
      %s18 = int_to_ptr.hbm [resolvable:$true] %s17
      %s19 = sshll.u32 [#allocation2], 4
      %s20 = int_to_ptr.vmem [resolvable:$true] %s19
      %25 = dma.hbm_to_vmem [thread:$0]  %s18, 32, %s20, [#allocation3], 32, 32, 2
    $region5: #{tpu_custom_call.1} parent=1 // pred_fallthru
      _
    // Predicated region
    $region6: #{tpu_custom_call.1} parent=1 // pred_check
      _
    $region7: #{tpu_custom_call.1} parent=1 // pred_check_branch
      %27 = sbr.rel (0) target = $region9
    $region8: #{tpu_custom_call.1} parent=1 // pred_region
      %29 = vsyncadd [#allocation6], 0
      %s30 = sshll.u32 %s1, 4
      %s31 = int_to_ptr.hbm [resolvable:$true] %s30
      %s32 = sshll.u32 [#allocation5], 4
      %s33 = int_to_ptr.vmem [resolvable:$true] %s32
      %38 = dma.hbm_to_vmem [thread:$0]  %s31, 256, %s33, [#allocation6], 128, 128, 8
    $region9: #{tpu_custom_call.1} parent=1 // pred_fallthru
      _
    // Predicated region
    $region10: #{tpu_custom_call.1} parent=1 // pred_check
      _
    $region11: #{tpu_custom_call.1} parent=1 // pred_check_branch
      %40 = sbr.rel (0) target = $region13
    $region12: #{tpu_custom_call.1} parent=1 // pred_region
      _
    $region13: #{tpu_custom_call.1} parent=1 // pred_fallthru
      _
    // Predicated region
    $region14: #{tpu_custom_call.1} parent=1 // pred_check
      _
    $region15: #{tpu_custom_call.1} parent=1 // pred_check_branch
      %42 = sbr.rel (0) target = $region17
    $region16: #{tpu_custom_call.1} parent=1 // pred_region
      %44 = vsyncadd [#allocation6], 0
      %s45 = sshll.u32 %s3, 4
      %s46 = int_to_ptr.hbm [resolvable:$true] %s45
      %s47 = sshll.u32 [#allocation7], 4
      %s48 = int_to_ptr.vmem [resolvable:$true] %s47
      %53 = dma.hbm_to_vmem [thread:$0]  %s46, 2048, %s48, [#allocation6], 128, 128, 8
    $region17: #{tpu_custom_call.1} parent=1 // pred_fallthru
      _
    // Predicated region
    $region18: #{tpu_custom_call.1} parent=1 // pred_check
      _
    $region19: #{tpu_custom_call.1} parent=1 // pred_check_branch
      %55 = sbr.rel (0) target = $region21
    $region20: #{tpu_custom_call.1} parent=1 // pred_region
      _
    $region21: #{tpu_custom_call.1} parent=1 // pred_fallthru
      _
    // Predicated region
    $region22: #{tpu_custom_call.1} parent=1 // pred_check
      _
    $region23: #{tpu_custom_call.1} parent=1 // pred_check_branch
      %57 = sbr.rel (0) target = $region25
    $region24: #{tpu_custom_call.1} parent=1 // pred_region
      %59 = dma.done [#allocation3], 128
    $region25: #{tpu_custom_call.1} parent=1 // pred_fallthru
      _
    // Predicated region
    $region26: #{tpu_custom_call.1} parent=1 // pred_check
      _
    $region27: #{tpu_custom_call.1} parent=1 // pred_check_branch
      %61 = sbr.rel (0) target = $region29
    $region28: #{tpu_custom_call.1} parent=1 // pred_region
      %63 = dma.done [#allocation6], 256
    $region29: #{tpu_custom_call.1} parent=1 // pred_fallthru
      _
    // Predicated region
    $region30: #{tpu_custom_call.1} parent=1 // pred_check
      _
    $region31: #{tpu_custom_call.1} parent=1 // pred_check_branch
      %65 = sbr.rel (0) target = $region33
    $region32: #{tpu_custom_call.1} parent=1 // pred_region
      %67 = dma.done [#allocation6], 2048
    $region33: #{tpu_custom_call.1} parent=1 // pred_fallthru
      _
    %v68 = vld [vmem:[#allocation2] sm:$0xff]
    %v69 = vld [vmem:[#allocation5] sm:$0xff]
    %v70 = vld [vmem:[#allocation5 + $0x8] sm:$0xff]
    %v71 = vld [vmem:[%s2] sm:$0x1]
    %v73 = vperm.slane %v71, 0
    %vm75 = vcmask 130048
    %v77 = vsel %vm75, %v68, 0
    %79 = vmatpush.msra.mxu0 0.0
    %80 = vmatpush.msra.mxu0 0.0
    %81 = vmatpush.msra.mxu0 0.0
    %82 = vmatpush.msra.mxu0 0.0
    %83 = vmatpush.msra.mxu0 0.0
    %84 = vmatpush.msra.mxu0 0.0
    %85 = vmatpush.msra.mxu0 0.0
    %86 = vmatpush.msra.mxu0 0.0
    %87 = vmatpush.msra.mxu0 0.0
    %88 = vmatpush.msra.mxu0 0.0
    %89 = vmatpush.msra.mxu0 0.0
    %90 = vmatpush.msra.mxu0 0.0
    %91 = vmatpush.msra.mxu0 0.0
    %92 = vmatpush.msra.mxu0 0.0
    %93 = vmatpush.msra.mxu0 %v70
    %94 = vmatpush.msra.mxu0 %v69
    %95 = vmatmul.f32.gmra.mxu0 %v77
    %v96 = vpop.f32.mrf.mxu0
    %v97 = vadd.f32 %v73, %v96
    %98 = vdwg.mxu0
    %v99 = vmax.f32 %v97, 0.0
    %v100 = vld [vmem:[#allocation7] sm:$0xff]
    %v101 = vld [vmem:[#allocation7 + $0x8] sm:$0xff]
    %v102 = vld [vmem:[#allocation7 + $0x10] sm:$0xff]
    %v103 = vld [vmem:[#allocation7 + $0x18] sm:$0xff]
    %v104 = vld [vmem:[#allocation7 + $0x20] sm:$0xff]
    %v105 = vld [vmem:[#allocation7 + $0x28] sm:$0xff]
    %v106 = vld [vmem:[#allocation7 + $0x30] sm:$0xff]
    %v107 = vld [vmem:[#allocation7 + $0x38] sm:$0xff]
    %v108 = vld [vmem:[#allocation7 + $0x40] sm:$0xff]
    %v109 = vld [vmem:[#allocation7 + $0x48] sm:$0xff]
    %v110 = vld [vmem:[#allocation7 + $0x50] sm:$0xff]
    %v111 = vld [vmem:[#allocation7 + $0x58] sm:$0xff]
    %v112 = vld [vmem:[#allocation7 + $0x60] sm:$0xff]
    %v113 = vld [vmem:[#allocation7 + $0x68] sm:$0xff]
    %v114 = vld [vmem:[#allocation7 + $0x70] sm:$0xff]
    %v115 = vld [vmem:[#allocation7 + $0x78] sm:$0xff]
    %v116 = vld [vmem:[%s4] sm:$0x1]
    %v118 = vperm.slane %v116, 0
    %120 = vmatpush.msra.mxu0 %v115
    %121 = vmatpush.msra.mxu0 %v114
    %122 = vmatpush.msra.mxu0 %v113
    %123 = vmatpush.msra.mxu0 %v112
    %124 = vmatpush.msra.mxu0 %v111
    %125 = vmatpush.msra.mxu0 %v110
    %126 = vmatpush.msra.mxu0 %v109
    %127 = vmatpush.msra.mxu0 %v108
    %128 = vmatpush.msra.mxu0 %v107
    %129 = vmatpush.msra.mxu0 %v106
    %130 = vmatpush.msra.mxu0 %v105
    %131 = vmatpush.msra.mxu0 %v104
    %132 = vmatpush.msra.mxu0 %v103
    %133 = vmatpush.msra.mxu0 %v102
    %134 = vmatpush.msra.mxu0 %v101
    %135 = vmatpush.msra.mxu0 %v100
    %136 = vmatmul.f32.gmra.mxu0 %v99
    %v137 = vpop.f32.mrf.mxu0
    %v138 = vadd.f32 %v118, %v137
    %139 = vdwg.mxu0
    %vm140 = vcmask 31744
    %141 = vst.msk [vmem:[#allocation8] sm:$0xff] %vm140, %v138
    // Predicated region
    $region34: #{tpu_custom_call.1} parent=1 // pred_check
      _
    $region35: #{tpu_custom_call.1} parent=1 // pred_check_branch
      %143 = sbr.rel (0) target = $region37
    $region36: #{tpu_custom_call.1} parent=1 // pred_region
      %145 = vsyncadd [#allocation4], 96
      %s146 = sshll.u32 [#allocation8], 4
      %s147 = int_to_ptr.vmem [resolvable:$true] %s146
      %s148 = sshll.u32 %s5, 4
      %s149 = int_to_ptr.hbm [resolvable:$true] %s148
      %154 = dma.vmem_to_hbm [thread:$0]  %s147, 32, %s149, [#allocation4], 32, 32, 2
    $region37: #{tpu_custom_call.1} parent=1 // pred_fallthru
      _
    // Predicated region
    $region38: #{tpu_custom_call.1} parent=1 // pred_check
      _
    $region39: #{tpu_custom_call.1} parent=1 // pred_check_branch
      %156 = sbr.rel (0) target = $region41
    $region40: #{tpu_custom_call.1} parent=1 // pred_region
      %158 = dma.done [#allocation4], 128
    $region41: #{tpu_custom_call.1} parent=1 // pred_fallthru
      _
    %159 = vsyncpa [#allocation3], 1
    %160 = vsyncpa [#allocation6], 1
    %161 = vsyncpa [#allocation4], 1

</llo_original>
